<compile_context>
chip_gen: v7x
topology: tpu7x:2x2x1
jax: 0.10.0
libtpu: 0.0.40
codegen_flags: <defaults>
</compile_context>

<pallas_src>
import functools

import jax
import jax.numpy as jnp
from jax.experimental import pallas as pl
from jax.experimental.pallas import tpu as pltpu


def _round_up(x: int, m: int) -> int:
    return ((x + m - 1) // m) * m


def _vmem_capacity_bytes() -> int:
    """Physical VMEM per TensorCore; conservative fallback (v7x = 64 MiB)."""
    try:
        info = pltpu.get_tpu_info()
        cap = getattr(info, "vmem_capacity_bytes", None)
        if cap:
            return int(cap)
    except Exception:
        pass
    return 64 * 1024 * 1024


def _conv2d_kernel(kh, kw, w_ref, b_ref, xm_ref, xh_ref, o_ref, slab_ref):
    """One row-tile of corr2d(x, w) + b.

    w_ref   : (kh*kw,)        f32 SMEM   flattened kernel taps
    b_ref   : (1,)            f32 SMEM   bias
    xm_ref  : (th, wp)        f32 VMEM   main input rows of this tile
    xh_ref  : (halo, wp)      f32 VMEM   halo rows (first rows of next tile)
    o_ref   : (th, wo)        f32 VMEM   output tile (real width, masked edge)
    slab_ref: (th + halo, wp) f32 VMEM   scratch: haloed input slab
    """
    th, wp = xm_ref.shape
    halo = xh_ref.shape[0]
    wo = o_ref.shape[1]

    # Stage the haloed input slab once (both stores are 8-sublane aligned).
    slab_ref[pl.ds(0, th), :] = xm_ref[...]
    slab_ref[pl.ds(th, halo), :] = xh_ref[...]

    # Bias-initialised accumulator: the only full-tile value kept live.
    acc = jnp.full((th, wp), b_ref[0], dtype=jnp.float32)

    # di outer / dj inner: each row tap is loaded once (kh loads total); the
    # column offset is realised with a lane roll on the scaled term (XLU has
    # slack: VALU is the binding unit at ~2 ops/tap/vreg), so no per-column
    # accumulators are ever simultaneously live.
    for di in range(kh):
        x_di = slab_ref[pl.ds(di, th), :]                # (th, wp)
        for dj in range(kw):
            term = w_ref[di * kw + dj] * x_di            # scalar (SMEM) * tile
            if dj == 0:
                acc = acc + term
            else:
                # Left-shift by dj lanes == roll by (wp - dj).  Wrapped lanes
                # land only in columns >= wo, which are never written back.
                acc = acc + pltpu.roll(term, shift=wp - dj, axis=1)

    # Single final store (lane-masked only on the ragged last vreg).
    o_ref[...] = acc[:, :wo]


def conv2d_pallas(x, weight, bias, *, row_tile: int = 512):
    x = jnp.asarray(x, jnp.float32)
    weight = jnp.asarray(weight, jnp.float32)
    bias = jnp.asarray(bias, jnp.float32).reshape(-1)

    h, w = x.shape
    kh, kw = weight.shape
    ho, wo = h - kh + 1, w - kw + 1
    assert ho >= 1 and wo >= 1, "kernel larger than input"

    # Row halo carried by a second small BlockSpec (multiple of 8 sublanes).
    halo = max(8, _round_up(kh - 1, 8))
    # Lane width of the input blocks (multiple of 128).
    wp = _round_up(w, 128)
    wo_p = _round_up(wo, 128)          # physical lane width of the output block

    # ---- row-tile selection ------------------------------------------------
    th = min(_round_up(row_tile, halo), _round_up(ho, halo))
    th = max(th, halo)
    # v7x has two TensorCores: ensure the ("parallel",) grid has >= 2 steps
    # whenever the image is tall enough to split.
    if ho >= 2 * halo and pl.cdiv(ho, th) < 2:
        th = _round_up(pl.cdiv(ho, 2), halo)

    # Shrink the tile until the double-buffered working set fits VMEM.
    vmem_cap = _vmem_capacity_bytes()
    budget = vmem_cap - (8 << 20)

    def working_set(t):
        # 2x main input + 2x halo + 2x output (double-buffered) + staging slab
        return 4 * (2 * t * wp + 2 * halo * wp + 2 * t * wo_p + (t + halo) * wp)

    while working_set(th) > budget and th > halo:
        th = max(halo, _round_up(th // 2, halo))

    grid_rows = pl.cdiv(ho, th)
    h_cover = grid_rows * th           # rows covered by the main blocks

    # ---- conditional input padding ------------------------------------------
    # Fast path: width already 128-lane aligned AND every input row a *valid*
    # output needs (they end at h-1) is covered without padding; only the tail
    # of the last halo block is (partially) out of bounds and those rows are
    # never read by the taps.  Otherwise pad once (zeros) to (h_cover+halo, wp).
    if (w % 128 == 0) and (h >= h_cover + kh - 1):
        x_in = x                                            # no extra HBM pass
    else:
        h_in = max(h, h_cover + halo)
        x_in = jnp.pad(x, ((0, h_in - h), (0, wp - w)))

    kernel = functools.partial(_conv2d_kernel, kh, kw)

    vmem_limit = int(min(vmem_cap - (1 << 20),
                         max(32 << 20, working_set(th) + (8 << 20))))

    # Truthful traffic estimate: padded input incl. halo re-reads + real output.
    cost = pl.CostEstimate(
        flops=2 * kh * kw * ho * wo,
        transcendentals=0,
        bytes_accessed=int(4 * (grid_rows * (th + halo) * wp + ho * wo)),
    )

    th_blocks = th // halo             # halo-block units per row tile

    out = pl.pallas_call(
        kernel,
        out_shape=jax.ShapeDtypeStruct((ho, wo), jnp.float32),
        grid=(grid_rows,),
        in_specs=[
            pl.BlockSpec(memory_space=pltpu.MemorySpace.SMEM),     # weight (kh*kw,)
            pl.BlockSpec(memory_space=pltpu.MemorySpace.SMEM),     # bias (1,)
            pl.BlockSpec((th, wp), lambda i: (i, 0)),              # main rows
            pl.BlockSpec((halo, wp),
                         lambda i: ((i + 1) * th_blocks, 0)),      # halo rows
        ],
        out_specs=pl.BlockSpec((th, wo), lambda i: (i, 0)),
        scratch_shapes=[pltpu.VMEM((th + halo, wp), jnp.float32)],
        compiler_params=pltpu.CompilerParams(
            dimension_semantics=("parallel",),
            vmem_limit_bytes=vmem_limit,
        ),
        cost_estimate=cost,
    )(weight.reshape(-1), bias, x_in, x_in)

    return out


def conv2d_ref(x, weight, bias):
    """Pure-JAX reference matching torch corr2d + bias semantics."""
    kh, kw = weight.shape
    ho, wo = x.shape[0] - kh + 1, x.shape[1] - kw + 1
    acc = jnp.zeros((ho, wo), jnp.float32)
    for di in range(kh):
        for dj in range(kw):
            acc = acc + weight[di, dj] * x[di:di + ho, dj:dj + wo]
    return acc + bias[0]


if __name__ == "__main__":
    key = jax.random.PRNGKey(0)
    kx, kw_ = jax.random.split(key)

    # Shapes consistent with the module: 16x16 input, 3x3 kernel.
    x = jax.random.normal(kx, (16, 16), dtype=jnp.float32)
    # nn.Parameter(torch.rand(kernel_size)) -> uniform[0,1) weights.
    weight = jax.random.uniform(kw_, (3, 3), dtype=jnp.float32)
    # nn.Parameter(torch.zeros(1)) -> zero bias.
    bias = jnp.zeros((1,), dtype=jnp.float32)

    out = jax.block_until_ready(conv2d_pallas(x, weight, bias))
    ref = conv2d_ref(x, weight, bias)
    assert out.shape == (14, 14), out.shape
    assert jnp.allclose(out, ref, atol=1e-4, rtol=1e-4), "mismatch vs reference"

    # Multi-row-tile / halo / padded-width path (2 grid steps).
    x2 = jax.random.normal(jax.random.PRNGKey(1), (70, 200), dtype=jnp.float32)
    out2 = jax.block_until_ready(conv2d_pallas(x2, weight, bias))
    ref2 = conv2d_ref(x2, weight, bias)
    assert out2.shape == ref2.shape, out2.shape
    assert jnp.allclose(out2, ref2, atol=1e-4, rtol=1e-4), "mismatch (tiled)"

    # 128-lane-aligned width + exact tile coverage: no-copy fast path,
    # two grid steps (sharded across TensorCores on v7x).
    x3 = jax.random.normal(jax.random.PRNGKey(2), (258, 128), dtype=jnp.float32)
    out3 = jax.block_until_ready(conv2d_pallas(x3, weight, bias))
    ref3 = conv2d_ref(x3, weight, bias)
    assert out3.shape == ref3.shape, out3.shape
    assert jnp.allclose(out3, ref3, atol=1e-4, rtol=1e-4), "mismatch (fast path)"

    print("KERNEL_OK")
</pallas_src>

<mosaic_0001>
module attributes {stable_mosaic.version = 11 : i64} {
  func.func @_conv2d_kernel(%arg0: i32, %arg1: memref<9xf32, #tpu.memory_space<smem>>, %arg2: memref<1xf32, #tpu.memory_space<smem>>, %arg3: memref<16x128xf32, #tpu.memory_space<vmem>>, %arg4: memref<8x128xf32, #tpu.memory_space<vmem>>, %arg5: memref<16x14xf32, #tpu.memory_space<vmem>>, %arg6: memref<24x128xf32, #tpu.memory_space<vmem>>) attributes {dimension_semantics = [#tpu.dimension_semantics<parallel>], iteration_bounds = array<i64: 1>, scalar_prefetch = 0 : i64, scratch_operands = 1 : i64, tpu.core_type = #tpu.core_type<tc>, window_params = [{transform_indices = @transform_0, window_bounds = array<i64: 9>}, {transform_indices = @transform_1, window_bounds = array<i64: 1>}, {transform_indices = @transform_2, window_bounds = array<i64: 16, 128>}, {transform_indices = @transform_3, window_bounds = array<i64: 8, 128>}, {transform_indices = @transform_4, window_bounds = array<i64: 16, 14>}]} {
    %c0 = arith.constant 0 : index
    %c0_0 = arith.constant 0 : index
    %0 = vector.load %arg3[%c0, %c0_0] : memref<16x128xf32, #tpu.memory_space<vmem>>, vector<16x128xf32>
    %c0_1 = arith.constant 0 : index
    %c0_2 = arith.constant 0 : index
    %1 = vector.load %arg6[%c0_1, %c0_2] : memref<24x128xf32, #tpu.memory_space<vmem>>, vector<16x128xf32>
    tpu.vector_store %arg6[%c0_1, %c0_2], %0 {strides = array<i32>} : memref<24x128xf32, #tpu.memory_space<vmem>>, vector<16x128xf32>,
    %c0_3 = arith.constant 0 : index
    %c0_4 = arith.constant 0 : index
    %2 = vector.load %arg4[%c0_3, %c0_4] : memref<8x128xf32, #tpu.memory_space<vmem>>, vector<8x128xf32>
    %c16 = arith.constant 16 : index
    %c0_5 = arith.constant 0 : index
    %3 = vector.load %arg6[%c16, %c0_5] : memref<24x128xf32, #tpu.memory_space<vmem>>, vector<8x128xf32>
    tpu.vector_store %arg6[%c16, %c0_5], %2 {strides = array<i32>} : memref<24x128xf32, #tpu.memory_space<vmem>>, vector<8x128xf32>,
    %c0_6 = arith.constant 0 : index
    %4 = memref.load %arg2[%c0_6] : memref<1xf32, #tpu.memory_space<smem>>
    %5 = vector.broadcast %4 : f32 to vector<16x128xf32>
    %c0_7 = arith.constant 0 : index
    %c0_8 = arith.constant 0 : index
    %6 = vector.load %arg6[%c0_7, %c0_8] : memref<24x128xf32, #tpu.memory_space<vmem>>, vector<16x128xf32>
    %c0_9 = arith.constant 0 : index
    %7 = memref.load %arg1[%c0_9] : memref<9xf32, #tpu.memory_space<smem>>
    %8 = vector.broadcast %7 : f32 to vector<16x128xf32>
    %9 = arith.mulf %8, %6 : vector<16x128xf32>
    %10 = arith.addf %5, %9 : vector<16x128xf32>
    %c1 = arith.constant 1 : index
    %11 = memref.load %arg1[%c1] : memref<9xf32, #tpu.memory_space<smem>>
    %12 = vector.broadcast %11 : f32 to vector<16x128xf32>
    %13 = arith.mulf %12, %6 : vector<16x128xf32>
    %c127_i32 = arith.constant 127 : i32
    %14 = tpu.dynamic_rotate %13 by %c127_i32 dim 1 : vector<16x128xf32>, i32 -> vector<16x128xf32>
    %15 = arith.addf %10, %14 : vector<16x128xf32>
    %c2 = arith.constant 2 : index
    %16 = memref.load %arg1[%c2] : memref<9xf32, #tpu.memory_space<smem>>
    %17 = vector.broadcast %16 : f32 to vector<16x128xf32>
    %18 = arith.mulf %17, %6 : vector<16x128xf32>
    %c126_i32 = arith.constant 126 : i32
    %19 = tpu.dynamic_rotate %18 by %c126_i32 dim 1 : vector<16x128xf32>, i32 -> vector<16x128xf32>
    %20 = arith.addf %15, %19 : vector<16x128xf32>
    %c1_10 = arith.constant 1 : index
    %c0_11 = arith.constant 0 : index
    %21 = vector.load %arg6[%c1_10, %c0_11] : memref<24x128xf32, #tpu.memory_space<vmem>>, vector<16x128xf32>
    %c3 = arith.constant 3 : index
    %22 = memref.load %arg1[%c3] : memref<9xf32, #tpu.memory_space<smem>>
    %23 = vector.broadcast %22 : f32 to vector<16x128xf32>
    %24 = arith.mulf %23, %21 : vector<16x128xf32>
    %25 = arith.addf %20, %24 : vector<16x128xf32>
    %c4 = arith.constant 4 : index
    %26 = memref.load %arg1[%c4] : memref<9xf32, #tpu.memory_space<smem>>
    %27 = vector.broadcast %26 : f32 to vector<16x128xf32>
    %28 = arith.mulf %27, %21 : vector<16x128xf32>
    %c127_i32_12 = arith.constant 127 : i32
    %29 = tpu.dynamic_rotate %28 by %c127_i32_12 dim 1 : vector<16x128xf32>, i32 -> vector<16x128xf32>
    %30 = arith.addf %25, %29 : vector<16x128xf32>
    %c5 = arith.constant 5 : index
    %31 = memref.load %arg1[%c5] : memref<9xf32, #tpu.memory_space<smem>>
    %32 = vector.broadcast %31 : f32 to vector<16x128xf32>
    %33 = arith.mulf %32, %21 : vector<16x128xf32>
    %c126_i32_13 = arith.constant 126 : i32
    %34 = tpu.dynamic_rotate %33 by %c126_i32_13 dim 1 : vector<16x128xf32>, i32 -> vector<16x128xf32>
    %35 = arith.addf %30, %34 : vector<16x128xf32>
    %c2_14 = arith.constant 2 : index
    %c0_15 = arith.constant 0 : index
    %36 = vector.load %arg6[%c2_14, %c0_15] : memref<24x128xf32, #tpu.memory_space<vmem>>, vector<16x128xf32>
    %c6 = arith.constant 6 : index
    %37 = memref.load %arg1[%c6] : memref<9xf32, #tpu.memory_space<smem>>
    %38 = vector.broadcast %37 : f32 to vector<16x128xf32>
    %39 = arith.mulf %38, %36 : vector<16x128xf32>
    %40 = arith.addf %35, %39 : vector<16x128xf32>
    %c7 = arith.constant 7 : index
    %41 = memref.load %arg1[%c7] : memref<9xf32, #tpu.memory_space<smem>>
    %42 = vector.broadcast %41 : f32 to vector<16x128xf32>
    %43 = arith.mulf %42, %36 : vector<16x128xf32>
    %c127_i32_16 = arith.constant 127 : i32
    %44 = tpu.dynamic_rotate %43 by %c127_i32_16 dim 1 : vector<16x128xf32>, i32 -> vector<16x128xf32>
    %45 = arith.addf %40, %44 : vector<16x128xf32>
    %c8 = arith.constant 8 : index
    %46 = memref.load %arg1[%c8] : memref<9xf32, #tpu.memory_space<smem>>
    %47 = vector.broadcast %46 : f32 to vector<16x128xf32>
    %48 = arith.mulf %47, %36 : vector<16x128xf32>
    %c126_i32_17 = arith.constant 126 : i32
    %49 = tpu.dynamic_rotate %48 by %c126_i32_17 dim 1 : vector<16x128xf32>, i32 -> vector<16x128xf32>
    %50 = arith.addf %45, %49 : vector<16x128xf32>
    %51 = vector.extract_strided_slice %50 {offsets = [0, 0], sizes = [16, 14], strides = [1, 1]} : vector<16x128xf32> to vector<16x14xf32>
    %c0_18 = arith.constant 0 : index
    %c0_19 = arith.constant 0 : index
    %52 = vector.load %arg5[%c0_18, %c0_19] : memref<16x14xf32, #tpu.memory_space<vmem>>, vector<16x14xf32>
    tpu.vector_store %arg5[%c0_18, %c0_19], %51 {strides = array<i32>} : memref<16x14xf32, #tpu.memory_space<vmem>>, vector<16x14xf32>,
    return
  }
  func.func @transform_0(%arg0: i32) -> i32 {
    %c0_i32 = arith.constant 0 : i32
    %c0_i32_0 = arith.constant 0 : i32
    return %c0_i32 : i32
  }
  func.func @transform_1(%arg0: i32) -> i32 {
    %c0_i32 = arith.constant 0 : i32
    %c0_i32_0 = arith.constant 0 : i32
    return %c0_i32 : i32
  }
  func.func @transform_2(%arg0: i32) -> (i32, i32) {
    %c0_i32 = arith.constant 0 : i32
    %c0_i32_0 = arith.constant 0 : i32
    return %arg0, %c0_i32 : i32, i32
  }
  func.func @transform_3(%arg0: i32) -> (i32, i32) {
    %c1_i32 = arith.constant 1 : i32
    %0 = arith.addi %arg0, %c1_i32 : i32
    %c2_i32 = arith.constant 2 : i32
    %1 = arith.muli %0, %c2_i32 : i32
    %c0_i32 = arith.constant 0 : i32
    %c0_i32_0 = arith.constant 0 : i32
    return %1, %c0_i32 : i32, i32
  }
  func.func @transform_4(%arg0: i32) -> (i32, i32) {
    %c0_i32 = arith.constant 0 : i32
    %c0_i32_0 = arith.constant 0 : i32
    return %arg0, %c0_i32 : i32, i32
  }
}

</mosaic_0001>

<llo_original>
// kernel: tpu_custom_call.1
$region0: #{tpu_custom_call.1}
  #allocation0 [shape = 'u32[]', space=smem, size = 0x4, offset = 0x4, fixed_abs, tag = 'smem constant byte address 0x4 - core index']
  #allocation1 [shape = 'u32[144,128]{1,0:T(1,128)}', space=vmem, size = 0x12000, scoped, tag = 'internal scratch']
  #allocation2 [shape = 'f32[24,128]{1,0:T(8,128)}', space=vmem, size = 0x3000, scoped, tag = 'scratch operand']
  #allocation3 [shape = 'f32[1]{0:T(128)S(6)}', space=smem, size = 0x200, scoped, tag = 'scoped memory for tpu_custom_call.1']
  %s0 = inlined_call_operand.vmem [shape: f32[9], index: 0, kind: input, shape index: {}]
  %s1 = inlined_call_operand.<no memory space> [shape: f32[1], index: 1, kind: input, shape index: {}]
  %s2 = inlined_call_operand.hbm [shape: f32[24,128], index: 2, kind: input, shape index: {}]
  %s3 = inlined_call_operand.hbm [shape: f32[24,128], index: 3, kind: input, shape index: {}]
  %s4 = inlined_call_operand.hbm [shape: f32[14,14], index: 4, kind: output, shape index: {}]
  %s5 = sld [smem:[#allocation0]]
  $region38: #{tpu_custom_call.1} parent=0
    _
  %s7 = ssub.s32 1, %s5
  %s8 = scalar_select 0, %s7, %s5
  %9 = sst [smem:[#allocation3]] %s1
  $region1: #{tpu_custom_call.1} parent=0
    #allocation4 [shape = 'u8[512]{0}', space=smem, size = 0x200, scoped, tag = 'input window, operand 0, single buffered']
    #allocation5 [shape = 's32[1]{0}', space=sflag, size = 0x4, scoped, tag = 'scoped memory for tpu_custom_call.1']
    #allocation6 [shape = 's32[1]{0}', space=sflag, size = 0x4, scoped, tag = 'scoped memory for tpu_custom_call.1']
    #allocation7 [shape = 's32[1]{0}', space=sflag, size = 0x4, scoped, tag = 'scoped memory for tpu_custom_call.1']
    #allocation8 [shape = 'u8[8192]{0}', space=vmem, size = 0x2000, scoped, tag = 'input window, operand 2, single buffered']
    #allocation9 [shape = 'u8[4096]{0}', space=vmem, size = 0x1000, scoped, tag = 'input window, operand 3, single buffered']
    #allocation10 [shape = 's32[1]{0}', space=sflag, size = 0x4, scoped, tag = 'scoped memory for tpu_custom_call.1']
    #allocation11 [shape = 'u8[8192]{0}', space=vmem, size = 0x2000, scoped, tag = 'output window, operand 0, single buffered']
    %10 = vsyncpa [#allocation7], 0
    %11 = vsyncpa [#allocation5], 0
    %12 = vsyncpa [#allocation10], 0
    %13 = vsyncpa [#allocation6], 0
    // Predicated region
    $region2: #{tpu_custom_call.1} parent=1 // pred_check
      _
    $region3: #{tpu_custom_call.1} parent=1 // pred_check_branch
      %15 = sbr.rel (0) target = $region5
    $region4: #{tpu_custom_call.1} parent=1 // pred_region
      %s17 = ssub.s32 16, 16
      %18 = vsyncadd [#allocation7], %s17
      %s20 = sshll.u32 %s0, 4
      %s21 = int_to_ptr.vmem [resolvable:$true] %s20
      %23 = dma.vmem_to_smem %s21, 16, [#allocation4], [#allocation7]
    $region5: #{tpu_custom_call.1} parent=1 // pred_fallthru
      _
    // Predicated region
    $region6: #{tpu_custom_call.1} parent=1 // pred_check
      _
    $region7: #{tpu_custom_call.1} parent=1 // pred_check_branch
      %25 = sbr.rel (0) target = $region9
    $region8: #{tpu_custom_call.1} parent=1 // pred_region
      _
    $region9: #{tpu_custom_call.1} parent=1 // pred_fallthru
      _
    // Predicated region
    $region10: #{tpu_custom_call.1} parent=1 // pred_check
      _
    $region11: #{tpu_custom_call.1} parent=1 // pred_check_branch
      %27 = sbr.rel (0) target = $region13
    $region12: #{tpu_custom_call.1} parent=1 // pred_region
      %s29 = ssub.s32 256, 256
      %30 = vsyncadd [#allocation5], %s29
      %s31 = sshll.u32 [#allocation8], 4
      %s32 = int_to_ptr.vmem [resolvable:$true] %s31
      %37 = dma.hbm_to_vmem [thread:$0]  %s2, 256, %s32, [#allocation5], 128, 128, 8
    $region13: #{tpu_custom_call.1} parent=1 // pred_fallthru
      _
    // Predicated region
    $region14: #{tpu_custom_call.1} parent=1 // pred_check
      _
    $region15: #{tpu_custom_call.1} parent=1 // pred_check_branch
      %39 = sbr.rel (0) target = $region17
    $region16: #{tpu_custom_call.1} parent=1 // pred_region
      %s40 = sadd.s32 0, 1
      %s41 = smul.u32 %s40, 2
      %s43 = ssub.s32 128, 128
      %44 = vsyncadd [#allocation10], %s43
      %s45 = smul.addr %s41, 128
      %s46 = scalar_lea.hbm %s3, %s45
      %s48 = sshll.u32 [#allocation9], 4
      %s49 = int_to_ptr.vmem [resolvable:$true] %s48
      %51 = dma.hbm_to_vmem [thread:$0]  %s46, 128, %s49, [#allocation10]
    $region17: #{tpu_custom_call.1} parent=1 // pred_fallthru
      _
    // Predicated region
    $region18: #{tpu_custom_call.1} parent=1 // pred_check
      _
    $region19: #{tpu_custom_call.1} parent=1 // pred_check_branch
      %53 = sbr.rel (0) target = $region21
    $region20: #{tpu_custom_call.1} parent=1 // pred_region
      %54 = dma.done [#allocation7], 16
    $region21: #{tpu_custom_call.1} parent=1 // pred_fallthru
      _
    // Predicated region
    $region22: #{tpu_custom_call.1} parent=1 // pred_check
      _
    $region23: #{tpu_custom_call.1} parent=1 // pred_check_branch
      %56 = sbr.rel (0) target = $region25
    $region24: #{tpu_custom_call.1} parent=1 // pred_region
      %57 = dma.done [#allocation5], 256
    $region25: #{tpu_custom_call.1} parent=1 // pred_fallthru
      _
    // Predicated region
    $region26: #{tpu_custom_call.1} parent=1 // pred_check
      _
    $region27: #{tpu_custom_call.1} parent=1 // pred_check_branch
      %59 = sbr.rel (0) target = $region29
    $region28: #{tpu_custom_call.1} parent=1 // pred_region
      %60 = dma.done [#allocation10], 128
    $region29: #{tpu_custom_call.1} parent=1 // pred_fallthru
      _
    %61 = sfence
    %s62 = sadd.s32 0, 1
    %s63 = smul.u32 %s62, 2
    %v64 = vld [vmem:[#allocation8] sm:$0xff]
    %v65 = vld [vmem:[#allocation8 + $0x8] sm:$0xff]
    %66 = vst [vmem:[#allocation2] sm:$0xff] %v64
    %67 = vst [vmem:[#allocation2 + $0x8] sm:$0xff] %v65
    %v68 = vld [vmem:[#allocation9] sm:$0xff]
    %69 = vst [vmem:[#allocation2 + $0x10] sm:$0xff] %v68
    %s70 = sld [smem:[#allocation3]]
    %v71 = vstv %s70
    %v72 = vld [vmem:[#allocation2] sm:$0xff]
    %v73 = vld [vmem:[#allocation2 + $0x8] sm:$0xff]
    %s74 = sld [smem:[#allocation4]]
    %v75 = vstv %s74
    %v76 = vmul.f32 %v75, %v72
    %v77 = vmul.f32 %v75, %v73
    %v78 = vadd.f32 %v71, %v76
    %v79 = vadd.f32 %v71, %v77
    %s80 = sld [smem:[#allocation4 + $0x1]]
    %v81 = vstv %s80
    %v82 = vmul.f32 %v81, %v72
    %v83 = vmul.f32 %v81, %v73
    %84 = vrot.lane.b32.xlu0 %v82, 127
    %v85 = vpop.permute.xlu0 %84
    %86 = vrot.lane.b32.xlu0 %v83, 127
    %v87 = vpop.permute.xlu0 %86
    %v88 = vadd.f32 %v78, %v85
    %v89 = vadd.f32 %v79, %v87
    %s90 = sld [smem:[#allocation4 + $0x2]]
    %v91 = vstv %s90
    %v92 = vmul.f32 %v91, %v72
    %v93 = vmul.f32 %v91, %v73
    %94 = vrot.lane.b32.xlu0 %v92, 126
    %v95 = vpop.permute.xlu0 %94
    %96 = vrot.lane.b32.xlu0 %v93, 126
    %v97 = vpop.permute.xlu0 %96
    %v98 = vadd.f32 %v88, %v95
    %v99 = vadd.f32 %v89, %v97
    %v100 = vld [vmem:[#allocation2 + $0x1] sm:$0xff]
    %v101 = vld [vmem:[#allocation2 + $0x9] sm:$0xff]
    %s102 = sld [smem:[#allocation4 + $0x3]]
    %v103 = vstv %s102
    %v104 = vmul.f32 %v103, %v100
    %v105 = vmul.f32 %v103, %v101
    %v106 = vadd.f32 %v98, %v104
    %v107 = vadd.f32 %v99, %v105
    %s108 = sld [smem:[#allocation4 + $0x4]]
    %v109 = vstv %s108
    %v110 = vmul.f32 %v109, %v100
    %v111 = vmul.f32 %v109, %v101
    %112 = vrot.lane.b32.xlu0 %v110, 127
    %v113 = vpop.permute.xlu0 %112
    %114 = vrot.lane.b32.xlu0 %v111, 127
    %v115 = vpop.permute.xlu0 %114
    %v116 = vadd.f32 %v106, %v113
    %v117 = vadd.f32 %v107, %v115
    %s118 = sld [smem:[#allocation4 + $0x5]]
    %v119 = vstv %s118
    %v120 = vmul.f32 %v119, %v100
    %v121 = vmul.f32 %v119, %v101
    %122 = vrot.lane.b32.xlu0 %v120, 126
    %v123 = vpop.permute.xlu0 %122
    %124 = vrot.lane.b32.xlu0 %v121, 126
    %v125 = vpop.permute.xlu0 %124
    %v126 = vadd.f32 %v116, %v123
    %v127 = vadd.f32 %v117, %v125
    %v128 = vld [vmem:[#allocation2 + $0x2] sm:$0xff]
    %v129 = vld [vmem:[#allocation2 + $0xa] sm:$0xff]
    %s130 = sld [smem:[#allocation4 + $0x6]]
    %v131 = vstv %s130
    %v132 = vmul.f32 %v131, %v128
    %v133 = vmul.f32 %v131, %v129
    %v134 = vadd.f32 %v126, %v132
    %v135 = vadd.f32 %v127, %v133
    %s136 = sld [smem:[#allocation4 + $0x7]]
    %v137 = vstv %s136
    %v138 = vmul.f32 %v137, %v128
    %v139 = vmul.f32 %v137, %v129
    %140 = vrot.lane.b32.xlu0 %v138, 127
    %v141 = vpop.permute.xlu0 %140
    %142 = vrot.lane.b32.xlu0 %v139, 127
    %v143 = vpop.permute.xlu0 %142
    %v144 = vadd.f32 %v134, %v141
    %v145 = vadd.f32 %v135, %v143
    %s146 = sld [smem:[#allocation4 + $0x8]]
    %v147 = vstv %s146
    %v148 = vmul.f32 %v147, %v128
    %v149 = vmul.f32 %v147, %v129
    %150 = vrot.lane.b32.xlu0 %v148, 126
    %v151 = vpop.permute.xlu0 %150
    %152 = vrot.lane.b32.xlu0 %v149, 126
    %v153 = vpop.permute.xlu0 %152
    %v154 = vadd.f32 %v144, %v151
    %v155 = vadd.f32 %v145, %v153
    %vm156 = vcmask 113664
    %157 = vst.msk [vmem:[#allocation11] sm:$0xff] %vm156, %v154
    %158 = vst.msk [vmem:[#allocation11 + $0x8] sm:$0xff] %vm156, %v155
    // Predicated region
    $region30: #{tpu_custom_call.1} parent=1 // pred_check
      _
    $region31: #{tpu_custom_call.1} parent=1 // pred_check_branch
      %160 = sbr.rel (0) target = $region33
    $region32: #{tpu_custom_call.1} parent=1 // pred_region
      %s162 = ssub.s32 256, 256
      %163 = vsyncadd [#allocation6], %s162
      %s164 = sshll.u32 [#allocation11], 4
      %s165 = int_to_ptr.vmem [resolvable:$true] %s164
      %170 = dma.vmem_to_hbm [thread:$0]  %s165, 256, %s4, [#allocation6], 128, 128, 8
    $region33: #{tpu_custom_call.1} parent=1 // pred_fallthru
      _
    // Predicated region
    $region34: #{tpu_custom_call.1} parent=1 // pred_check
      _
    $region35: #{tpu_custom_call.1} parent=1 // pred_check_branch
      %172 = sbr.rel (0) target = $region37
    $region36: #{tpu_custom_call.1} parent=1 // pred_region
      %173 = dma.done [#allocation6], 256
    $region37: #{tpu_custom_call.1} parent=1 // pred_fallthru
      _
    %174 = vsyncpa [#allocation5], 1
    %175 = vsyncpa [#allocation10], 1
    %176 = vsyncpa [#allocation6], 1
    %177 = vsyncpa [#allocation7], 1

</llo_original>
